<compile_context>
chip_gen: v7x
topology: tpu7x:2x2x1
jax: 0.10.0
libtpu: 0.0.40
codegen_flags: <defaults>
</compile_context>

<pallas_src>
import functools

import jax
import jax.numpy as jnp
from jax.experimental import pallas as pl
from jax.experimental.pallas import tpu as pltpu


def _rotation_kernel(w_ref, wt_ref, x_ref, o_ref, *, batch, d, f_block):
    # w_ref / wt_ref: (f_block, d, d)
    # x_ref / o_ref : (batch, f_block, d, d)
    for fi in range(f_block):
        w = w_ref[fi]      # (d, d)
        wt = wt_ref[fi]    # (d, d), precomputed W[f]^T (no in-kernel transpose)

        # Stack the batch rows into the MXU M dimension: (batch, d, d) -> (batch*d, d).
        # d is a multiple of 8 sublanes, so this reshape is layout-preserving.
        x = x_ref[:, fi].reshape(batch * d, d)
        y = jnp.dot(x, wt, preferred_element_type=jnp.float32)   # (batch*d, d), f32 acc
        # Keep both MXU operands in the input dtype (no-op for f32, native rate for bf16).
        y = y.astype(x_ref.dtype)

        # Left-multiply by W per batch element (contraction is over y's row axis,
        # so it cannot be stacked into M without a transpose).
        for b in range(batch):
            yb = y[b * d:(b + 1) * d, :]                          # (d, d), static slice
            out_b = jnp.dot(w, yb, preferred_element_type=jnp.float32)
            o_ref[b, fi] = out_b.astype(o_ref.dtype)


def _pick_f_block(n_freq):
    """Largest f_block dividing n_freq that still leaves >= 2 grid steps
    (keeps a parallel axis for v7x's two TensorCores)."""
    best = 1
    for cand in range(1, n_freq + 1):
        if n_freq % cand == 0 and n_freq // cand >= 2:
            best = cand
    return best


def rotation_forward(W, X, *, f_block=None):
    """W: (n_freq, d, d), X: (B, n_freq, d, d) -> (B, n_freq, d, d)."""
    B, n_freq, d, _ = X.shape
    assert W.shape == (n_freq, d, d), (W.shape, X.shape)

    if f_block is None:
        f_block = _pick_f_block(n_freq)
    assert n_freq % f_block == 0

    # Hoist the transpose out of the kernel; this fuses into the XLA graph.
    WT = W.swapaxes(1, 2)

    kernel = functools.partial(_rotation_kernel, batch=B, d=d, f_block=f_block)
    grid = (n_freq // f_block,)

    return pl.pallas_call(
        kernel,
        out_shape=jax.ShapeDtypeStruct((B, n_freq, d, d), X.dtype),
        grid_spec=pltpu.PrefetchScalarGridSpec(
            num_scalar_prefetch=0,
            grid=grid,
            in_specs=[
                pl.BlockSpec((f_block, d, d), lambda f: (f, 0, 0)),        # W[f-block]
                pl.BlockSpec((f_block, d, d), lambda f: (f, 0, 0)),        # W[f-block]^T
                pl.BlockSpec((B, f_block, d, d), lambda f: (0, f, 0, 0)),  # X[:, f-block]
            ],
            out_specs=pl.BlockSpec((B, f_block, d, d), lambda f: (0, f, 0, 0)),
        ),
        compiler_params=pltpu.CompilerParams(
            dimension_semantics=("parallel",)
        ),
    )(W, WT, X)


def make_stiefel_weights(key, n_freq, d, dtype=jnp.float32):
    """Deterministic Stiefel-manifold (orthogonal) W of shape (n_freq, d, d).

    The PyTorch module initializes W = eye(d) (already on the manifold); here
    we use QR of a random matrix so the kernel is exercised non-trivially
    while still being a valid point on the Stiefel manifold.
    """
    a = jax.random.normal(key, (n_freq, d, d), dtype=jnp.float32)
    q, _ = jnp.linalg.qr(a)
    return q.astype(dtype)


if __name__ == "__main__":
    B, n_freq, d = 2, 4, 32
    key = jax.random.PRNGKey(0)
    k_w, k_x = jax.random.split(key)

    W = make_stiefel_weights(k_w, n_freq, d, dtype=jnp.float32)
    X = jax.random.normal(k_x, (B, n_freq, d, d), dtype=jnp.float32)

    out = rotation_forward(W, X)
    out = jax.block_until_ready(out)

    # Reference: W[f] @ X[b, f] @ W[f]^T  (matches torch.matmul broadcasting)
    ref = jnp.einsum("fij,bfjk,flk->bfil", W, X, W)

    assert out.shape == (B, n_freq, d, d), out.shape
    assert jnp.allclose(out, ref, atol=1e-4, rtol=1e-4), (
        float(jnp.max(jnp.abs(out - ref)))
    )
    print("KERNEL_OK")
</pallas_src>

<mosaic_0001>
module attributes {stable_mosaic.version = 11 : i64} {
  func.func @_rotation_kernel(%arg0: i32, %arg1: memref<2x32x32xf32, #tpu.memory_space<vmem>>, %arg2: memref<2x32x32xf32, #tpu.memory_space<vmem>>, %arg3: memref<2x2x32x32xf32, #tpu.memory_space<vmem>>, %arg4: memref<2x2x32x32xf32, #tpu.memory_space<vmem>>) attributes {dimension_semantics = [#tpu.dimension_semantics<parallel>], iteration_bounds = array<i64: 2>, scalar_prefetch = 0 : i64, scratch_operands = 0 : i64, tpu.core_type = #tpu.core_type<tc>, window_params = [{transform_indices = @transform_0, window_bounds = array<i64: 2, 32, 32>}, {transform_indices = @transform_1, window_bounds = array<i64: 2, 32, 32>}, {transform_indices = @transform_2, window_bounds = array<i64: 2, 2, 32, 32>}, {transform_indices = @transform_3, window_bounds = array<i64: 2, 2, 32, 32>}]} {
    %c0 = arith.constant 0 : index
    %c0_0 = arith.constant 0 : index
    %c0_1 = arith.constant 0 : index
    %0 = vector.load %arg1[%c0, %c0_0, %c0_1] : memref<2x32x32xf32, #tpu.memory_space<vmem>>, vector<1x32x32xf32>
    %1 = vector.shape_cast %0 : vector<1x32x32xf32> to vector<32x32xf32>
    %c0_2 = arith.constant 0 : index
    %c0_3 = arith.constant 0 : index
    %c0_4 = arith.constant 0 : index
    %2 = vector.load %arg2[%c0_2, %c0_3, %c0_4] : memref<2x32x32xf32, #tpu.memory_space<vmem>>, vector<1x32x32xf32>
    %3 = vector.shape_cast %2 : vector<1x32x32xf32> to vector<32x32xf32>
    %c0_5 = arith.constant 0 : index
    %c0_6 = arith.constant 0 : index
    %c0_7 = arith.constant 0 : index
    %c0_8 = arith.constant 0 : index
    %4 = vector.load %arg3[%c0_5, %c0_6, %c0_7, %c0_8] : memref<2x2x32x32xf32, #tpu.memory_space<vmem>>, vector<2x1x32x32xf32>
    %5 = vector.shape_cast %4 : vector<2x1x32x32xf32> to vector<2x32x32xf32>
    %6 = vector.shape_cast %5 : vector<2x32x32xf32> to vector<64x32xf32>
    %cst = arith.constant dense<0.000000e+00> : vector<64x32xf32>
    %7 = tpu.matmul %6, %3, %cst {dimension_numbers = #tpu.dot_dimension_numbers<[1], [0], [0], [1], [0, 0, 1, 1], [], []>} : vector<64x32xf32>, vector<32x32xf32>, vector<64x32xf32> -> vector<64x32xf32>
    %8 = vector.extract_strided_slice %7 {offsets = [0, 0], sizes = [32, 32], strides = [1, 1]} : vector<64x32xf32> to vector<32x32xf32>
    %cst_9 = arith.constant dense<0.000000e+00> : vector<32x32xf32>
    %9 = tpu.matmul %1, %8, %cst_9 {dimension_numbers = #tpu.dot_dimension_numbers<[1], [0], [0], [1], [0, 0, 1, 1], [], []>} : vector<32x32xf32>, vector<32x32xf32>, vector<32x32xf32> -> vector<32x32xf32>
    %c0_10 = arith.constant 0 : index
    %c0_11 = arith.constant 0 : index
    %c0_12 = arith.constant 0 : index
    %c0_13 = arith.constant 0 : index
    %10 = vector.load %arg4[%c0_10, %c0_11, %c0_12, %c0_13] : memref<2x2x32x32xf32, #tpu.memory_space<vmem>>, vector<1x1x32x32xf32>
    %11 = vector.shape_cast %10 : vector<1x1x32x32xf32> to vector<32x32xf32>
    %12 = vector.shape_cast %9 : vector<32x32xf32> to vector<1x1x32x32xf32>
    tpu.vector_store %arg4[%c0_10, %c0_11, %c0_12, %c0_13], %12 {strides = array<i32>} : memref<2x2x32x32xf32, #tpu.memory_space<vmem>>, vector<1x1x32x32xf32>,
    %13 = vector.extract_strided_slice %7 {offsets = [32, 0], sizes = [32, 32], strides = [1, 1]} : vector<64x32xf32> to vector<32x32xf32>
    %cst_14 = arith.constant dense<0.000000e+00> : vector<32x32xf32>
    %14 = tpu.matmul %1, %13, %cst_14 {dimension_numbers = #tpu.dot_dimension_numbers<[1], [0], [0], [1], [0, 0, 1, 1], [], []>} : vector<32x32xf32>, vector<32x32xf32>, vector<32x32xf32> -> vector<32x32xf32>
    %c1 = arith.constant 1 : index
    %c0_15 = arith.constant 0 : index
    %c0_16 = arith.constant 0 : index
    %c0_17 = arith.constant 0 : index
    %15 = vector.load %arg4[%c1, %c0_15, %c0_16, %c0_17] : memref<2x2x32x32xf32, #tpu.memory_space<vmem>>, vector<1x1x32x32xf32>
    %16 = vector.shape_cast %15 : vector<1x1x32x32xf32> to vector<32x32xf32>
    %17 = vector.shape_cast %14 : vector<32x32xf32> to vector<1x1x32x32xf32>
    tpu.vector_store %arg4[%c1, %c0_15, %c0_16, %c0_17], %17 {strides = array<i32>} : memref<2x2x32x32xf32, #tpu.memory_space<vmem>>, vector<1x1x32x32xf32>,
    %c1_18 = arith.constant 1 : index
    %c0_19 = arith.constant 0 : index
    %c0_20 = arith.constant 0 : index
    %18 = vector.load %arg1[%c1_18, %c0_19, %c0_20] : memref<2x32x32xf32, #tpu.memory_space<vmem>>, vector<1x32x32xf32>
    %19 = vector.shape_cast %18 : vector<1x32x32xf32> to vector<32x32xf32>
    %c1_21 = arith.constant 1 : index
    %c0_22 = arith.constant 0 : index
    %c0_23 = arith.constant 0 : index
    %20 = vector.load %arg2[%c1_21, %c0_22, %c0_23] : memref<2x32x32xf32, #tpu.memory_space<vmem>>, vector<1x32x32xf32>
    %21 = vector.shape_cast %20 : vector<1x32x32xf32> to vector<32x32xf32>
    %c0_24 = arith.constant 0 : index
    %c1_25 = arith.constant 1 : index
    %c0_26 = arith.constant 0 : index
    %c0_27 = arith.constant 0 : index
    %22 = vector.load %arg3[%c0_24, %c1_25, %c0_26, %c0_27] : memref<2x2x32x32xf32, #tpu.memory_space<vmem>>, vector<2x1x32x32xf32>
    %23 = vector.shape_cast %22 : vector<2x1x32x32xf32> to vector<2x32x32xf32>
    %24 = vector.shape_cast %23 : vector<2x32x32xf32> to vector<64x32xf32>
    %cst_28 = arith.constant dense<0.000000e+00> : vector<64x32xf32>
    %25 = tpu.matmul %24, %21, %cst_28 {dimension_numbers = #tpu.dot_dimension_numbers<[1], [0], [0], [1], [0, 0, 1, 1], [], []>} : vector<64x32xf32>, vector<32x32xf32>, vector<64x32xf32> -> vector<64x32xf32>
    %26 = vector.extract_strided_slice %25 {offsets = [0, 0], sizes = [32, 32], strides = [1, 1]} : vector<64x32xf32> to vector<32x32xf32>
    %cst_29 = arith.constant dense<0.000000e+00> : vector<32x32xf32>
    %27 = tpu.matmul %19, %26, %cst_29 {dimension_numbers = #tpu.dot_dimension_numbers<[1], [0], [0], [1], [0, 0, 1, 1], [], []>} : vector<32x32xf32>, vector<32x32xf32>, vector<32x32xf32> -> vector<32x32xf32>
    %c0_30 = arith.constant 0 : index
    %c1_31 = arith.constant 1 : index
    %c0_32 = arith.constant 0 : index
    %c0_33 = arith.constant 0 : index
    %28 = vector.load %arg4[%c0_30, %c1_31, %c0_32, %c0_33] : memref<2x2x32x32xf32, #tpu.memory_space<vmem>>, vector<1x1x32x32xf32>
    %29 = vector.shape_cast %28 : vector<1x1x32x32xf32> to vector<32x32xf32>
    %30 = vector.shape_cast %27 : vector<32x32xf32> to vector<1x1x32x32xf32>
    tpu.vector_store %arg4[%c0_30, %c1_31, %c0_32, %c0_33], %30 {strides = array<i32>} : memref<2x2x32x32xf32, #tpu.memory_space<vmem>>, vector<1x1x32x32xf32>,
    %31 = vector.extract_strided_slice %25 {offsets = [32, 0], sizes = [32, 32], strides = [1, 1]} : vector<64x32xf32> to vector<32x32xf32>
    %cst_34 = arith.constant dense<0.000000e+00> : vector<32x32xf32>
    %32 = tpu.matmul %19, %31, %cst_34 {dimension_numbers = #tpu.dot_dimension_numbers<[1], [0], [0], [1], [0, 0, 1, 1], [], []>} : vector<32x32xf32>, vector<32x32xf32>, vector<32x32xf32> -> vector<32x32xf32>
    %c1_35 = arith.constant 1 : index
    %c1_36 = arith.constant 1 : index
    %c0_37 = arith.constant 0 : index
    %c0_38 = arith.constant 0 : index
    %33 = vector.load %arg4[%c1_35, %c1_36, %c0_37, %c0_38] : memref<2x2x32x32xf32, #tpu.memory_space<vmem>>, vector<1x1x32x32xf32>
    %34 = vector.shape_cast %33 : vector<1x1x32x32xf32> to vector<32x32xf32>
    %35 = vector.shape_cast %32 : vector<32x32xf32> to vector<1x1x32x32xf32>
    tpu.vector_store %arg4[%c1_35, %c1_36, %c0_37, %c0_38], %35 {strides = array<i32>} : memref<2x2x32x32xf32, #tpu.memory_space<vmem>>, vector<1x1x32x32xf32>,
    return
  }
  func.func @transform_0(%arg0: i32) -> (i32, i32, i32) {
    %c0_i32 = arith.constant 0 : i32
    %c0_i32_0 = arith.constant 0 : i32
    %c0_i32_1 = arith.constant 0 : i32
    return %arg0, %c0_i32, %c0_i32_0 : i32, i32, i32
  }
  func.func @transform_1(%arg0: i32) -> (i32, i32, i32) {
    %c0_i32 = arith.constant 0 : i32
    %c0_i32_0 = arith.constant 0 : i32
    %c0_i32_1 = arith.constant 0 : i32
    return %arg0, %c0_i32, %c0_i32_0 : i32, i32, i32
  }
  func.func @transform_2(%arg0: i32) -> (i32, i32, i32, i32) {
    %c0_i32 = arith.constant 0 : i32
    %c0_i32_0 = arith.constant 0 : i32
    %c0_i32_1 = arith.constant 0 : i32
    %c0_i32_2 = arith.constant 0 : i32
    return %c0_i32, %arg0, %c0_i32_0, %c0_i32_1 : i32, i32, i32, i32
  }
  func.func @transform_3(%arg0: i32) -> (i32, i32, i32, i32) {
    %c0_i32 = arith.constant 0 : i32
    %c0_i32_0 = arith.constant 0 : i32
    %c0_i32_1 = arith.constant 0 : i32
    %c0_i32_2 = arith.constant 0 : i32
    return %c0_i32, %arg0, %c0_i32_0, %c0_i32_1 : i32, i32, i32, i32
  }
}

</mosaic_0001>

<llo_original>
// kernel: tpu_custom_call.1
$region0: #{tpu_custom_call.1}
  #allocation0 [shape = 'u32[]', space=smem, size = 0x4, offset = 0x4, fixed_abs, tag = 'smem constant byte address 0x4 - core index']
  #allocation1 [shape = 'u32[144,128]{1,0:T(1,128)}', space=vmem, size = 0x12000, scoped, tag = 'internal scratch']
  #allocation9 [shape = 's32[]', space=sflag, size = 0x4, offset = 0, fixed_abs, tag = 'sflag constant byte address 0x0 - dummy sync flag']
  #allocation11 [shape = 's32[]', space=sflag, size = 0x4, offset = 0, fixed_abs, tag = 'sflag constant byte address 0x0 - dummy sync flag']
  %s0 = inlined_call_operand.hbm [shape: f32[4,32,32], index: 0, kind: input, shape index: {}]
  %s1 = inlined_call_operand.hbm [shape: f32[4,32,32], index: 1, kind: input, shape index: {}]
  %s2 = inlined_call_operand.hbm [shape: f32[2,4,32,32], index: 2, kind: input, shape index: {}]
  %s3 = inlined_call_operand.hbm [shape: f32[2,4,32,32], index: 3, kind: output, shape index: {}]
  %s4 = sld [smem:[#allocation0]]
  $region57: #{tpu_custom_call.1} parent=0
    _
  %s6 = ssub.s32 1, %s4
  %s7 = scalar_select 0, %s6, %s4
  $region1: #{tpu_custom_call.1} parent=0
    #allocation2 [shape = 'u8[65536]{0}', space=vmem, size = 0x10000, scoped, tag = 'input window, operand 0']
    #allocation3 [shape = 's32[2]{0}', space=sflag, size = 0x8, scoped, tag = 'scoped memory for tpu_custom_call.1']
    #allocation4 [shape = 's32[2]{0}', space=sflag, size = 0x8, scoped, tag = 'scoped memory for tpu_custom_call.1']
    #allocation5 [shape = 'u8[65536]{0}', space=vmem, size = 0x10000, scoped, tag = 'input window, operand 1']
    #allocation6 [shape = 's32[2]{0}', space=sflag, size = 0x8, scoped, tag = 'scoped memory for tpu_custom_call.1']
    #allocation7 [shape = 'u8[131072]{0}', space=vmem, size = 0x20000, scoped, tag = 'input window, operand 2']
    #allocation8 [shape = 'u8[131072]{0}', space=vmem, size = 0x20000, scoped, tag = 'output window, operand 0']
    %8 = vsyncpa [#allocation3], 0
    %s9 = scalar_lea.sflag [#allocation3], 1
    %10 = vsyncpa %s9, 0
    %11 = vsyncpa [#allocation6], 0
    %s12 = scalar_lea.sflag [#allocation6], 1
    %13 = vsyncpa %s12, 0
    %14 = vsyncpa [#allocation4], 0
    %s15 = scalar_lea.sflag [#allocation4], 1
    %16 = vsyncpa %s15, 0
    loop: start=0, step=1, limit=4
    $region2: #{tpu_custom_call.1} parent=1 // loop_pre_header
      _
    $region3: #{tpu_custom_call.1} parent=1 // loop_header
      %s18 = sphi 0, %s22
      %p19 = scmp.ge.s32.totalorder %s18, 4
      %s28 = sphi 0, %s30
      %s31 = sphi 0, %s28
      %s32 = sphi 0, %s31
      %s48 = sphi 0, %s32
      %s54 = sphi 0, %s56
      %s57 = sphi 0, %s54
      %s58 = sphi 0, %s57
      %s74 = sphi 0, %s58
      %s80 = sphi 0, %s82
      %s83 = sphi 0, %s80
      %s84 = sphi 0, %s83
      %s100 = sphi 0, %s84
      %s106 = sphi 0, %s108
      %s109 = sphi 0, %s106
      %s110 = sphi 0, %s109
      %s126 = sphi 0, %s110
    $region4: #{tpu_custom_call.1} parent=1 // loop_header_branch
      %21 = sbr.rel (%p19) target = $region8
    $region5: #{tpu_custom_call.1} parent=1 // loop_body
      %s23 = ssub.s32 %s18, 1
      %s24 = ssub.s32 %s18, 2
      %s25 = sadd.s32 %s18, 1
      %s26 = ssub.s32 %s18, %s25
      %p27 = scmp.eq.s32.totalorder %s26, 0
      %s29 = sadd.s32 %s28, 1
      %s30 = scalar_select %p27, %s28, %s29
      %p33 = pneg %p27
      %p34 = scmp.eq.s32.totalorder %s18, 1
      %p35 = por %p33, %p34
      %p36 = scmp.ne.s32.totalorder %s28, %s31
      %p37 = scmp.eq.s32.totalorder %s18, 0
      %p38 = por %p36, %p37
      %p39 = scmp.ne.s32.totalorder %s28, %s31
      %p40 = scmp.eq.s32.totalorder %s23, 1
      %p41 = por %p39, %p40
      %p42 = scmp.ne.s32.totalorder %s31, %s32
      %p43 = scmp.eq.s32.totalorder %s23, 0
      %p44 = por %p42, %p43
      %p45 = scmp.ne.s32.totalorder %s31, %s32
      %p46 = scmp.eq.s32.totalorder %s24, 1
      %p47 = por %p45, %p46
      %p49 = scmp.ne.s32.totalorder %s32, %s48
      %p50 = scmp.eq.s32.totalorder %s24, 0
      %p51 = por %p49, %p50
      %s52 = ssub.s32 %s18, %s25
      %p53 = scmp.eq.s32.totalorder %s52, 0
      %s55 = sadd.s32 %s54, 1
      %s56 = scalar_select %p53, %s54, %s55
      %p59 = pneg %p53
      %p60 = scmp.eq.s32.totalorder %s18, 1
      %p61 = por %p59, %p60
      %p62 = scmp.ne.s32.totalorder %s54, %s57
      %p63 = scmp.eq.s32.totalorder %s18, 0
      %p64 = por %p62, %p63
      %p65 = scmp.ne.s32.totalorder %s54, %s57
      %p66 = scmp.eq.s32.totalorder %s23, 1
      %p67 = por %p65, %p66
      %p68 = scmp.ne.s32.totalorder %s57, %s58
      %p69 = scmp.eq.s32.totalorder %s23, 0
      %p70 = por %p68, %p69
      %p71 = scmp.ne.s32.totalorder %s57, %s58
      %p72 = scmp.eq.s32.totalorder %s24, 1
      %p73 = por %p71, %p72
      %p75 = scmp.ne.s32.totalorder %s58, %s74
      %p76 = scmp.eq.s32.totalorder %s24, 0
      %p77 = por %p75, %p76
      %s78 = ssub.s32 %s18, %s25
      %p79 = scmp.eq.s32.totalorder %s78, 0
      %s81 = sadd.s32 %s80, 1
      %s82 = scalar_select %p79, %s80, %s81
      %p85 = pneg %p79
      %p86 = scmp.eq.s32.totalorder %s18, 1
      %p87 = por %p85, %p86
      %p88 = scmp.ne.s32.totalorder %s80, %s83
      %p89 = scmp.eq.s32.totalorder %s18, 0
      %p90 = por %p88, %p89
      %p91 = scmp.ne.s32.totalorder %s80, %s83
      %p92 = scmp.eq.s32.totalorder %s23, 1
      %p93 = por %p91, %p92
      %p94 = scmp.ne.s32.totalorder %s83, %s84
      %p95 = scmp.eq.s32.totalorder %s23, 0
      %p96 = por %p94, %p95
      %p97 = scmp.ne.s32.totalorder %s83, %s84
      %p98 = scmp.eq.s32.totalorder %s24, 1
      %p99 = por %p97, %p98
      %p101 = scmp.ne.s32.totalorder %s84, %s100
      %p102 = scmp.eq.s32.totalorder %s24, 0
      %p103 = por %p101, %p102
      %s104 = ssub.s32 %s18, %s25
      %p105 = scmp.eq.s32.totalorder %s104, 0
      %s107 = sadd.s32 %s106, 1
      %s108 = scalar_select %p105, %s106, %s107
      %p111 = pneg %p105
      %p112 = scmp.eq.s32.totalorder %s18, 1
      %p113 = por %p111, %p112
      %p114 = scmp.ne.s32.totalorder %s106, %s109
      %p115 = scmp.eq.s32.totalorder %s18, 0
      %p116 = por %p114, %p115
      %p117 = scmp.ne.s32.totalorder %s106, %s109
      %p118 = scmp.eq.s32.totalorder %s23, 1
      %p119 = por %p117, %p118
      %p120 = scmp.ne.s32.totalorder %s109, %s110
      %p121 = scmp.eq.s32.totalorder %s23, 0
      %p122 = por %p120, %p121
      %p123 = scmp.ne.s32.totalorder %s109, %s110
      %p124 = scmp.eq.s32.totalorder %s24, 1
      %p125 = por %p123, %p124
      %p127 = scmp.ne.s32.totalorder %s110, %s126
      %p128 = scmp.eq.s32.totalorder %s24, 0
      %p129 = por %p127, %p128
      %p130 = scmp.le.s32.totalorder 1, %s18
      %p131 = scmp.lt.s32.totalorder %s18, 3
      %p132 = pnand %p130, %p131
      %p133 = pneg %p132
      // Predicated region
      $region9: #{tpu_custom_call.1} parent=5 // pred_check
        _
      $region10: #{tpu_custom_call.1} parent=5 // pred_check_branch
        %135 = sbr.rel (%p132) target = $region12
      $region11: #{tpu_custom_call.1} parent=5 // pred_region
        %s136 = ssub.s32 %s18, 1
      $region12: #{tpu_custom_call.1} parent=5 // pred_fallthru
        _
      %p137 = scmp.lt.s32.totalorder %s18, 2
      // Predicated region
      $region13: #{tpu_custom_call.1} parent=5 // pred_check
        %p138 = pneg %p137
      $region14: #{tpu_custom_call.1} parent=5 // pred_check_branch
        %140 = sbr.rel (%p138) target = $region16
      $region15: #{tpu_custom_call.1} parent=5 // pred_region
        // Predicated region
        $region17: #{tpu_custom_call.1} parent=15 // pred_check
          %p141 = pneg %p38
        $region18: #{tpu_custom_call.1} parent=15 // pred_check_branch
          %143 = sbr.rel (%p141) target = $region20
        $region19: #{tpu_custom_call.1} parent=15 // pred_region
          %s144 = sand.u32 %s28, 1
          %s145 = scalar_lea.sflag [#allocation3], %s144
          %s146 = sand.u32 %s28, 1
          %s147 = smul.addr %s146, 64
          %s148 = scalar_lea.vmem [#allocation2], %s147
          %s149 = smul.u32 2, %s18
          %s151 = ssub.s32 1024, 1024
          %152 = vsyncadd %s145, %s151
          %s153 = smul.addr %s149, 4
          %s154 = smul.addr %s153, 128
          %s155 = scalar_lea.hbm %s0, %s154
          %s156 = sshll.u32 %s148, 4
          %s157 = int_to_ptr.vmem [resolvable:$true] %s156
          %162 = dma.hbm_to_vmem [thread:$0]  %s155, 1024, %s157, %s145, 128, 128, 8
        $region20: #{tpu_custom_call.1} parent=15 // pred_fallthru
          _
        // Predicated region
        $region21: #{tpu_custom_call.1} parent=15 // pred_check
          %p163 = pneg %p64
        $region22: #{tpu_custom_call.1} parent=15 // pred_check_branch
          %165 = sbr.rel (%p163) target = $region24
        $region23: #{tpu_custom_call.1} parent=15 // pred_region
          %s166 = sand.u32 %s18, 1
          %s167 = scalar_lea.sflag [#allocation6], %s166
          %s168 = sand.u32 %s54, 1
          %s169 = smul.addr %s168, 64
          %s170 = scalar_lea.vmem [#allocation5], %s169
          %s171 = smul.u32 2, %s18
          %s173 = ssub.s32 1024, 1024
          %174 = vsyncadd %s167, %s173
          %s175 = smul.addr %s171, 4
          %s176 = smul.addr %s175, 128
          %s177 = scalar_lea.hbm %s1, %s176
          %s178 = sshll.u32 %s170, 4
          %s179 = int_to_ptr.vmem [resolvable:$true] %s178
          %184 = dma.hbm_to_vmem [thread:$0]  %s177, 1024, %s179, %s167, 128, 128, 8
        $region24: #{tpu_custom_call.1} parent=15 // pred_fallthru
          _
        // Predicated region
        $region25: #{tpu_custom_call.1} parent=15 // pred_check
          %p185 = pneg %p90
        $region26: #{tpu_custom_call.1} parent=15 // pred_check_branch
          %187 = sbr.rel (%p185) target = $region28
        $region27: #{tpu_custom_call.1} parent=15 // pred_region
          #allocation10 [shape = 'u32[6]{0}', space=smem, size = 0x18, scoped, tag = 'DMA stride descriptor']
          %s188 = sand.u32 %s18, 1
          %s189 = scalar_lea.sflag [#allocation6], %s188
          %s190 = sand.u32 %s80, 1
          %s191 = smul.addr %s190, 128
          %s192 = scalar_lea.vmem [#allocation7], %s191
          %s193 = smul.u32 2, %s18
          %s195 = ssub.s32 2048, 2048
          %196 = vsyncadd %s189, %s195
          %s197 = smul.addr %s193, 4
          %s198 = smul.addr %s197, 128
          %s199 = scalar_lea.hbm %s2, %s198
          %s201 = sshll.u32 1, 14
          %s202 = sxor.u32 4294967295, %s201
          %s204 = sld [smem:[#allocation0]]
          %s205 = sadd.s32 2, %s204
          %s207 = sshll.u32 7, 26
          %s208 = sxor.u32 4294967295, %s207
          %s209 = sand.u32 0, %s208
          %s210 = sshll.u32 %s205, 26
          %s211 = sor.u32 %s209, %s210
          %s212 = sshll.u32 %s192, 4
          %s213 = int_to_ptr.vmem [resolvable:$true] %s212
          %219 = sst [smem:[#allocation10]] 2048
          %s220 = scalar_lea.smem [#allocation10], 1
          %221 = sst [smem:[%s220]] 1024
          %s222 = scalar_lea.smem [#allocation10], 2
          %223 = sst [smem:[%s222]] 8
          %s224 = scalar_lea.smem [#allocation10], 3
          %225 = sst [smem:[%s224]] 128
          %s226 = scalar_lea.smem [#allocation10], 4
          %227 = sst [smem:[%s226]] 128
          %s228 = scalar_lea.smem [#allocation10], 5
          %229 = sst [smem:[%s228]] 8
          %231 = dma.general %s199, 2048, %s213, %s189, [#allocation9], [#allocation10], %s211, 0
        $region28: #{tpu_custom_call.1} parent=15 // pred_fallthru
          _
      $region16: #{tpu_custom_call.1} parent=5 // pred_fallthru
        _
      %p232 = scmp.le.s32.totalorder 1, %s18
      %p233 = scmp.lt.s32.totalorder %s18, 3
      %p234 = pnand %p232, %p233
      %p235 = pneg %p234
      // Predicated region
      $region29: #{tpu_custom_call.1} parent=5 // pred_check
        _
      $region30: #{tpu_custom_call.1} parent=5 // pred_check_branch
        %237 = sbr.rel (%p234) target = $region32
      $region31: #{tpu_custom_call.1} parent=5 // pred_region
        %s238 = ssub.s32 %s18, 1
        %s239 = sand.u32 %s31, 1
        %s240 = scalar_lea.sflag [#allocation3], %s239
        %s241 = sand.u32 %s31, 1
        %s242 = smul.addr %s241, 64
        %s243 = scalar_lea.vmem [#allocation2], %s242
        // Predicated region
        $region33: #{tpu_custom_call.1} parent=31 // pred_check
          %p244 = pneg %p44
        $region34: #{tpu_custom_call.1} parent=31 // pred_check_branch
          %246 = sbr.rel (%p244) target = $region36
        $region35: #{tpu_custom_call.1} parent=31 // pred_region
          %247 = dma.done %s240, 1024
        $region36: #{tpu_custom_call.1} parent=31 // pred_fallthru
          _
        %s248 = sand.u32 %s23, 1
        %s249 = scalar_lea.sflag [#allocation6], %s248
        %s250 = sand.u32 %s57, 1
        %s251 = smul.addr %s250, 64
        %s252 = scalar_lea.vmem [#allocation5], %s251
        // Predicated region
        $region37: #{tpu_custom_call.1} parent=31 // pred_check
          %p253 = pneg %p70
        $region38: #{tpu_custom_call.1} parent=31 // pred_check_branch
          %255 = sbr.rel (%p253) target = $region40
        $region39: #{tpu_custom_call.1} parent=31 // pred_region
          %256 = dma.done %s249, 1024
        $region40: #{tpu_custom_call.1} parent=31 // pred_fallthru
          _
        %s257 = sand.u32 %s23, 1
        %s258 = scalar_lea.sflag [#allocation6], %s257
        %s259 = sand.u32 %s83, 1
        %s260 = smul.addr %s259, 128
        %s261 = scalar_lea.vmem [#allocation7], %s260
        // Predicated region
        $region41: #{tpu_custom_call.1} parent=31 // pred_check
          %p262 = pneg %p96
        $region42: #{tpu_custom_call.1} parent=31 // pred_check_branch
          %264 = sbr.rel (%p262) target = $region44
        $region43: #{tpu_custom_call.1} parent=31 // pred_region
          %265 = dma.done %s258, 2048
        $region44: #{tpu_custom_call.1} parent=31 // pred_fallthru
          _
        %s266 = sand.u32 %s31, 1
        %s267 = scalar_lea.sflag [#allocation3], %s266
        %s268 = sand.u32 %s31, 1
        %s269 = smul.addr %s268, 64
        %s270 = scalar_lea.vmem [#allocation2], %s269
        %p271 = pneg %p44
        %p272 = pneg %p41
        %s273 = sand.u32 %s23, 1
        %s274 = scalar_lea.sflag [#allocation6], %s273
        %s275 = sand.u32 %s57, 1
        %s276 = smul.addr %s275, 64
        %s277 = scalar_lea.vmem [#allocation5], %s276
        %p278 = pneg %p70
        %p279 = pneg %p67
        %s280 = sand.u32 %s23, 1
        %s281 = scalar_lea.sflag [#allocation6], %s280
        %s282 = sand.u32 %s83, 1
        %s283 = smul.addr %s282, 128
        %s284 = scalar_lea.vmem [#allocation7], %s283
        %p285 = pneg %p96
        %p286 = pneg %p93
        %p287 = pneg %p122
        %p288 = pneg %p119
        %s289 = sand.u32 %s109, 1
        %s290 = scalar_lea.sflag [#allocation4], %s289
        %s291 = sand.u32 %s109, 1
        %s292 = smul.addr %s291, 128
        %s293 = scalar_lea.vmem [#allocation8], %s292
        %s294 = smul.u32 2, %s23
        %s295 = smul.u32 2, %s23
        %s296 = smul.u32 2, %s23
        %s297 = smul.u32 2, %s23
        %v298 = vld [vmem:[%s243] sm:$0xff]
        %v299 = vld [vmem:[%s243 + $0x8] sm:$0xff]
        %v300 = vld [vmem:[%s243 + $0x10] sm:$0xff]
        %v301 = vld [vmem:[%s243 + $0x18] sm:$0xff]
        %v302 = vld [vmem:[%s252] sm:$0xff]
        %v303 = vld [vmem:[%s252 + $0x8] sm:$0xff]
        %v304 = vld [vmem:[%s252 + $0x10] sm:$0xff]
        %v305 = vld [vmem:[%s252 + $0x18] sm:$0xff]
        %v306 = vld [vmem:[%s261] sm:$0xff]
        %v307 = vld [vmem:[%s261 + $0x8] sm:$0xff]
        %v308 = vld [vmem:[%s261 + $0x10] sm:$0xff]
        %v309 = vld [vmem:[%s261 + $0x18] sm:$0xff]
        %v310 = vld [vmem:[%s261 + $0x40] sm:$0xff]
        %v311 = vld [vmem:[%s261 + $0x48] sm:$0xff]
        %v312 = vld [vmem:[%s261 + $0x50] sm:$0xff]
        %v313 = vld [vmem:[%s261 + $0x58] sm:$0xff]
        %vm314 = vcmask 261120
        %v316 = vsel %vm314, %v306, 0
        %v319 = vsel %vm314, %v307, 0
        %v322 = vsel %vm314, %v308, 0
        %v325 = vsel %vm314, %v309, 0
        %v328 = vsel %vm314, %v310, 0
        %v331 = vsel %vm314, %v311, 0
        %v334 = vsel %vm314, %v312, 0
        %v337 = vsel %vm314, %v313, 0
        %339 = vmatprep.subr.mxu0 0.0
        %340 = vmatpush1.msra.mxu0 %v302
        %341 = vmatprep.subr.mxu0 0.0
        %342 = vmatpush1.msra.mxu0 %v303
        %343 = vmatprep.subr.mxu0 0.0
        %344 = vmatpush1.msra.mxu0 %v304
        %345 = vmatprep.subr.mxu0 0.0
        %346 = vmatpush1.msra.mxu0 %v305
        %347 = vmatprep.subr.mxu0 0.0
        %348 = vmatpush1.msra.mxu0 0.0
        %349 = vmatprep.subr.mxu0 0.0
        %350 = vmatpush1.msra.mxu0 0.0
        %351 = vmatprep.subr.mxu0 0.0
        %352 = vmatpush1.msra.mxu0 0.0
        %353 = vmatprep.subr.mxu0 0.0
        %354 = vmatpush1.msra.mxu0 0.0
        %355 = vmatprep.subr.mxu0 0.0
        %356 = vmatpush1.msra.mxu0 0.0
        %357 = vmatprep.subr.mxu0 0.0
        %358 = vmatpush1.msra.mxu0 0.0
        %359 = vmatprep.subr.mxu0 0.0
        %360 = vmatpush1.msra.mxu0 0.0
        %361 = vmatprep.subr.mxu0 0.0
        %362 = vmatpush1.msra.mxu0 0.0
        %363 = vmatprep.subr.mxu0 0.0
        %364 = vmatpush1.msra.mxu0 0.0
        %365 = vmatprep.subr.mxu0 0.0
        %366 = vmatpush1.msra.mxu0 0.0
        %367 = vmatprep.subr.mxu0 0.0
        %368 = vmatpush1.msra.mxu0 0.0
        %369 = vmatprep.subr.mxu0 0.0
        %370 = vmatpush1.msra.mxu0 0.0
        %371 = vmatprep.subr.mxu0 0.0
        %372 = vmatpush1.msra.mxu0 0.0
        %373 = vmatprep.subr.mxu0 0.0
        %374 = vmatpush1.msra.mxu0 0.0
        %375 = vmatprep.subr.mxu0 0.0
        %376 = vmatpush1.msra.mxu0 0.0
        %377 = vmatprep.subr.mxu0 0.0
        %378 = vmatpush1.msra.mxu0 0.0
        %379 = vmatprep.subr.mxu0 0.0
        %380 = vmatpush1.msra.mxu0 0.0
        %381 = vmatprep.subr.mxu0 0.0
        %382 = vmatpush1.msra.mxu0 0.0
        %383 = vmatprep.subr.mxu0 0.0
        %384 = vmatpush1.msra.mxu0 0.0
        %385 = vmatprep.subr.mxu0 0.0
        %386 = vmatpush1.msra.mxu0 0.0
        %387 = vmatprep.subr.mxu0 0.0
        %388 = vmatpush1.msra.mxu0 0.0
        %389 = vmatprep.subr.mxu0 0.0
        %390 = vmatpush1.msra.mxu0 0.0
        %391 = vmatprep.subr.mxu0 0.0
        %392 = vmatpush1.msra.mxu0 0.0
        %393 = vmatprep.subr.mxu0 0.0
        %394 = vmatpush1.msra.mxu0 0.0
        %395 = vmatprep.subr.mxu0 0.0
        %396 = vmatpush1.msra.mxu0 0.0
        %397 = vmatprep.subr.mxu0 0.0
        %398 = vmatpush1.msra.mxu0 0.0
        %399 = vmatprep.subr.mxu0 0.0
        %400 = vmatpush1.msra.mxu0 0.0
        %401 = vmatprep.subr.mxu0 0.0
        %402 = vmatpush1.msra.mxu0 0.0
        %403 = vmatprep.mubr.f32.mxu0 0.0
        %404 = vmatmul.mubr.f32.gmra.mrb[0].mxu0 %v316
        %v405 = vpop.f32.mrb[0].mxu0
        %v406 = vadd.f32 0.0, %v405
        %v407 = vpop.f32.mrb[0].mxu0
        %408 = vmatprep.mubr.f32.mxu0 0.0
        %409 = vmatmul.mubr.f32.gmra.mrb[0].mxu0 %v319
        %v410 = vpop.f32.mrb[0].mxu0
        %v411 = vadd.f32 0.0, %v410
        %v412 = vpop.f32.mrb[0].mxu0
        %413 = vmatprep.mubr.f32.mxu0 0.0
        %414 = vmatmul.mubr.f32.gmra.mrb[0].mxu0 %v322
        %v415 = vpop.f32.mrb[0].mxu0
        %v416 = vadd.f32 0.0, %v415
        %v417 = vpop.f32.mrb[0].mxu0
        %418 = vmatprep.mubr.f32.mxu0 0.0
        %419 = vmatmul.mubr.f32.gmra.mrb[0].mxu0 %v325
        %v420 = vpop.f32.mrb[0].mxu0
        %v421 = vadd.f32 0.0, %v420
        %v422 = vpop.f32.mrb[0].mxu0
        %423 = vmatprep.mubr.f32.mxu0 0.0
        %424 = vmatmul.mubr.f32.gmra.mrb[0].mxu0 %v328
        %v425 = vpop.f32.mrb[0].mxu0
        %v426 = vadd.f32 0.0, %v425
        %v427 = vpop.f32.mrb[0].mxu0
        %428 = vmatprep.mubr.f32.mxu0 0.0
        %429 = vmatmul.mubr.f32.gmra.mrb[0].mxu0 %v331
        %v430 = vpop.f32.mrb[0].mxu0
        %v431 = vadd.f32 0.0, %v430
        %v432 = vpop.f32.mrb[0].mxu0
        %433 = vmatprep.mubr.f32.mxu0 0.0
        %434 = vmatmul.mubr.f32.gmra.mrb[0].mxu0 %v334
        %v435 = vpop.f32.mrb[0].mxu0
        %v436 = vadd.f32 0.0, %v435
        %v437 = vpop.f32.mrb[0].mxu0
        %438 = vmatprep.mubr.f32.mxu0 0.0
        %439 = vmatmul.mubr.f32.gmra.mrb[0].mxu0 %v337
        %v440 = vpop.f32.mrb[0].mxu0
        %v441 = vadd.f32 0.0, %v440
        %v442 = vpop.f32.mrb[0].mxu0
        %443 = vdwg.mxu0
        %v445 = vsel %vm314, %v298, 0
        %v448 = vsel %vm314, %v299, 0
        %v451 = vsel %vm314, %v300, 0
        %v454 = vsel %vm314, %v301, 0
        %456 = vmatprep.subr.mxu0 0.0
        %457 = vmatpush1.msra.mxu0 %v406
        %458 = vmatprep.subr.mxu0 0.0
        %459 = vmatpush1.msra.mxu0 %v411
        %460 = vmatprep.subr.mxu0 0.0
        %461 = vmatpush1.msra.mxu0 %v416
        %462 = vmatprep.subr.mxu0 0.0
        %463 = vmatpush1.msra.mxu0 %v421
        %464 = vmatprep.subr.mxu0 0.0
        %465 = vmatpush1.msra.mxu0 0.0
        %466 = vmatprep.subr.mxu0 0.0
        %467 = vmatpush1.msra.mxu0 0.0
        %468 = vmatprep.subr.mxu0 0.0
        %469 = vmatpush1.msra.mxu0 0.0
        %470 = vmatprep.subr.mxu0 0.0
        %471 = vmatpush1.msra.mxu0 0.0
        %472 = vmatprep.subr.mxu0 0.0
        %473 = vmatpush1.msra.mxu0 0.0
        %474 = vmatprep.subr.mxu0 0.0
        %475 = vmatpush1.msra.mxu0 0.0
        %476 = vmatprep.subr.mxu0 0.0
        %477 = vmatpush1.msra.mxu0 0.0
        %478 = vmatprep.subr.mxu0 0.0
        %479 = vmatpush1.msra.mxu0 0.0
        %480 = vmatprep.subr.mxu0 0.0
        %481 = vmatpush1.msra.mxu0 0.0
        %482 = vmatprep.subr.mxu0 0.0
        %483 = vmatpush1.msra.mxu0 0.0
        %484 = vmatprep.subr.mxu0 0.0
        %485 = vmatpush1.msra.mxu0 0.0
        %486 = vmatprep.subr.mxu0 0.0
        %487 = vmatpush1.msra.mxu0 0.0
        %488 = vmatprep.subr.mxu0 0.0
        %489 = vmatpush1.msra.mxu0 0.0
        %490 = vmatprep.subr.mxu0 0.0
        %491 = vmatpush1.msra.mxu0 0.0
        %492 = vmatprep.subr.mxu0 0.0
        %493 = vmatpush1.msra.mxu0 0.0
        %494 = vmatprep.subr.mxu0 0.0
        %495 = vmatpush1.msra.mxu0 0.0
        %496 = vmatprep.subr.mxu0 0.0
        %497 = vmatpush1.msra.mxu0 0.0
        %498 = vmatprep.subr.mxu0 0.0
        %499 = vmatpush1.msra.mxu0 0.0
        %500 = vmatprep.subr.mxu0 0.0
        %501 = vmatpush1.msra.mxu0 0.0
        %502 = vmatprep.subr.mxu0 0.0
        %503 = vmatpush1.msra.mxu0 0.0
        %504 = vmatprep.subr.mxu0 0.0
        %505 = vmatpush1.msra.mxu0 0.0
        %506 = vmatprep.subr.mxu0 0.0
        %507 = vmatpush1.msra.mxu0 0.0
        %508 = vmatprep.subr.mxu0 0.0
        %509 = vmatpush1.msra.mxu0 0.0
        %510 = vmatprep.subr.mxu0 0.0
        %511 = vmatpush1.msra.mxu0 0.0
        %512 = vmatprep.subr.mxu0 0.0
        %513 = vmatpush1.msra.mxu0 0.0
        %514 = vmatprep.subr.mxu0 0.0
        %515 = vmatpush1.msra.mxu0 0.0
        %516 = vmatprep.subr.mxu0 0.0
        %517 = vmatpush1.msra.mxu0 0.0
        %518 = vmatprep.subr.mxu0 0.0
        %519 = vmatpush1.msra.mxu0 0.0
        %520 = vmatprep.mubr.f32.mxu0 0.0
        %521 = vmatmul.mubr.f32.gmra.mrb[0].mxu0 %v445
        %v522 = vpop.f32.mrb[0].mxu0
        %v523 = vadd.f32 0.0, %v522
        %v524 = vpop.f32.mrb[0].mxu0
        %525 = vmatprep.mubr.f32.mxu0 0.0
        %526 = vmatmul.mubr.f32.gmra.mrb[0].mxu0 %v448
        %v527 = vpop.f32.mrb[0].mxu0
        %v528 = vadd.f32 0.0, %v527
        %v529 = vpop.f32.mrb[0].mxu0
        %530 = vmatprep.mubr.f32.mxu0 0.0
        %531 = vmatmul.mubr.f32.gmra.mrb[0].mxu0 %v451
        %v532 = vpop.f32.mrb[0].mxu0
        %v533 = vadd.f32 0.0, %v532
        %v534 = vpop.f32.mrb[0].mxu0
        %535 = vmatprep.mubr.f32.mxu0 0.0
        %536 = vmatmul.mubr.f32.gmra.mrb[0].mxu0 %v454
        %v537 = vpop.f32.mrb[0].mxu0
        %v538 = vadd.f32 0.0, %v537
        %v539 = vpop.f32.mrb[0].mxu0
        %540 = vdwg.mxu0
        %541 = vst.msk [vmem:[%s293] sm:$0xff] %vm314, %v523
        %542 = vst.msk [vmem:[%s293 + $0x8] sm:$0xff] %vm314, %v528
        %543 = vst.msk [vmem:[%s293 + $0x10] sm:$0xff] %vm314, %v533
        %544 = vst.msk [vmem:[%s293 + $0x18] sm:$0xff] %vm314, %v538
        %545 = vmatprep.subr.mxu0 0.0
        %546 = vmatpush1.msra.mxu0 %v426
        %547 = vmatprep.subr.mxu0 0.0
        %548 = vmatpush1.msra.mxu0 %v431
        %549 = vmatprep.subr.mxu0 0.0
        %550 = vmatpush1.msra.mxu0 %v436
        %551 = vmatprep.subr.mxu0 0.0
        %552 = vmatpush1.msra.mxu0 %v441
        %553 = vmatprep.subr.mxu0 0.0
        %554 = vmatpush1.msra.mxu0 0.0
        %555 = vmatprep.subr.mxu0 0.0
        %556 = vmatpush1.msra.mxu0 0.0
        %557 = vmatprep.subr.mxu0 0.0
        %558 = vmatpush1.msra.mxu0 0.0
        %559 = vmatprep.subr.mxu0 0.0
        %560 = vmatpush1.msra.mxu0 0.0
        %561 = vmatprep.subr.mxu0 0.0
        %562 = vmatpush1.msra.mxu0 0.0
        %563 = vmatprep.subr.mxu0 0.0
        %564 = vmatpush1.msra.mxu0 0.0
        %565 = vmatprep.subr.mxu0 0.0
        %566 = vmatpush1.msra.mxu0 0.0
        %567 = vmatprep.subr.mxu0 0.0
        %568 = vmatpush1.msra.mxu0 0.0
        %569 = vmatprep.subr.mxu0 0.0
        %570 = vmatpush1.msra.mxu0 0.0
        %571 = vmatprep.subr.mxu0 0.0
        %572 = vmatpush1.msra.mxu0 0.0
        %573 = vmatprep.subr.mxu0 0.0
        %574 = vmatpush1.msra.mxu0 0.0
        %575 = vmatprep.subr.mxu0 0.0
        %576 = vmatpush1.msra.mxu0 0.0
        %577 = vmatprep.subr.mxu0 0.0
        %578 = vmatpush1.msra.mxu0 0.0
        %579 = vmatprep.subr.mxu0 0.0
        %580 = vmatpush1.msra.mxu0 0.0
        %581 = vmatprep.subr.mxu0 0.0
        %582 = vmatpush1.msra.mxu0 0.0
        %583 = vmatprep.subr.mxu0 0.0
        %584 = vmatpush1.msra.mxu0 0.0
        %585 = vmatprep.subr.mxu0 0.0
        %586 = vmatpush1.msra.mxu0 0.0
        %587 = vmatprep.subr.mxu0 0.0
        %588 = vmatpush1.msra.mxu0 0.0
        %589 = vmatprep.subr.mxu0 0.0
        %590 = vmatpush1.msra.mxu0 0.0
        %591 = vmatprep.subr.mxu0 0.0
        %592 = vmatpush1.msra.mxu0 0.0
        %593 = vmatprep.subr.mxu0 0.0
        %594 = vmatpush1.msra.mxu0 0.0
        %595 = vmatprep.subr.mxu0 0.0
        %596 = vmatpush1.msra.mxu0 0.0
        %597 = vmatprep.subr.mxu0 0.0
        %598 = vmatpush1.msra.mxu0 0.0
        %599 = vmatprep.subr.mxu0 0.0
        %600 = vmatpush1.msra.mxu0 0.0
        %601 = vmatprep.subr.mxu0 0.0
        %602 = vmatpush1.msra.mxu0 0.0
        %603 = vmatprep.subr.mxu0 0.0
        %604 = vmatpush1.msra.mxu0 0.0
        %605 = vmatprep.subr.mxu0 0.0
        %606 = vmatpush1.msra.mxu0 0.0
        %607 = vmatprep.subr.mxu0 0.0
        %608 = vmatpush1.msra.mxu0 0.0
        %609 = vmatprep.mubr.f32.mxu0 0.0
        %610 = vmatmul.mubr.f32.gmra.mrb[0].mxu0 %v445
        %v611 = vpop.f32.mrb[0].mxu0
        %v612 = vadd.f32 0.0, %v611
        %v613 = vpop.f32.mrb[0].mxu0
        %614 = vmatprep.mubr.f32.mxu0 0.0
        %615 = vmatmul.mubr.f32.gmra.mrb[0].mxu0 %v448
        %v616 = vpop.f32.mrb[0].mxu0
        %v617 = vadd.f32 0.0, %v616
        %v618 = vpop.f32.mrb[0].mxu0
        %619 = vmatprep.mubr.f32.mxu0 0.0
        %620 = vmatmul.mubr.f32.gmra.mrb[0].mxu0 %v451
        %v621 = vpop.f32.mrb[0].mxu0
        %v622 = vadd.f32 0.0, %v621
        %v623 = vpop.f32.mrb[0].mxu0
        %624 = vmatprep.mubr.f32.mxu0 0.0
        %625 = vmatmul.mubr.f32.gmra.mrb[0].mxu0 %v454
        %v626 = vpop.f32.mrb[0].mxu0
        %v627 = vadd.f32 0.0, %v626
        %v628 = vpop.f32.mrb[0].mxu0
        %629 = vdwg.mxu0
        %s630 = scalar_lea.vmem %s293, 64 [#allocation8]
        %631 = vst.msk [vmem:[%s630] sm:$0xff] %vm314, %v612
        %632 = vst.msk [vmem:[%s630 + $0x8] sm:$0xff] %vm314, %v617
        %633 = vst.msk [vmem:[%s630 + $0x10] sm:$0xff] %vm314, %v622
        %634 = vst.msk [vmem:[%s630 + $0x18] sm:$0xff] %vm314, %v627
        %s635 = scalar_lea.vmem %s243, 32 [#allocation2]
        %v636 = vld [vmem:[%s635] sm:$0xff]
        %v637 = vld [vmem:[%s635 + $0x8] sm:$0xff]
        %v638 = vld [vmem:[%s635 + $0x10] sm:$0xff]
        %v639 = vld [vmem:[%s635 + $0x18] sm:$0xff]
        %s640 = scalar_lea.vmem %s252, 32 [#allocation5]
        %v641 = vld [vmem:[%s640] sm:$0xff]
        %v642 = vld [vmem:[%s640 + $0x8] sm:$0xff]
        %v643 = vld [vmem:[%s640 + $0x10] sm:$0xff]
        %v644 = vld [vmem:[%s640 + $0x18] sm:$0xff]
        %s645 = scalar_lea.vmem %s261, 32 [#allocation7]
        %v646 = vld [vmem:[%s645] sm:$0xff]
        %v647 = vld [vmem:[%s645 + $0x8] sm:$0xff]
        %v648 = vld [vmem:[%s645 + $0x10] sm:$0xff]
        %v649 = vld [vmem:[%s645 + $0x18] sm:$0xff]
        %v650 = vld [vmem:[%s645 + $0x40] sm:$0xff]
        %v651 = vld [vmem:[%s645 + $0x48] sm:$0xff]
        %v652 = vld [vmem:[%s645 + $0x50] sm:$0xff]
        %v653 = vld [vmem:[%s645 + $0x58] sm:$0xff]
        %v655 = vsel %vm314, %v646, 0
        %v658 = vsel %vm314, %v647, 0
        %v661 = vsel %vm314, %v648, 0
        %v664 = vsel %vm314, %v649, 0
        %v667 = vsel %vm314, %v650, 0
        %v670 = vsel %vm314, %v651, 0
        %v673 = vsel %vm314, %v652, 0
        %v676 = vsel %vm314, %v653, 0
        %678 = vmatprep.subr.mxu0 0.0
        %679 = vmatpush1.msra.mxu0 %v641
        %680 = vmatprep.subr.mxu0 0.0
        %681 = vmatpush1.msra.mxu0 %v642
        %682 = vmatprep.subr.mxu0 0.0
        %683 = vmatpush1.msra.mxu0 %v643
        %684 = vmatprep.subr.mxu0 0.0
        %685 = vmatpush1.msra.mxu0 %v644
        %686 = vmatprep.subr.mxu0 0.0
        %687 = vmatpush1.msra.mxu0 0.0
        %688 = vmatprep.subr.mxu0 0.0
        %689 = vmatpush1.msra.mxu0 0.0
        %690 = vmatprep.subr.mxu0 0.0
        %691 = vmatpush1.msra.mxu0 0.0
        %692 = vmatprep.subr.mxu0 0.0
        %693 = vmatpush1.msra.mxu0 0.0
        %694 = vmatprep.subr.mxu0 0.0
        %695 = vmatpush1.msra.mxu0 0.0
        %696 = vmatprep.subr.mxu0 0.0
        %697 = vmatpush1.msra.mxu0 0.0
        %698 = vmatprep.subr.mxu0 0.0
        %699 = vmatpush1.msra.mxu0 0.0
        %700 = vmatprep.subr.mxu0 0.0
        %701 = vmatpush1.msra.mxu0 0.0
        %702 = vmatprep.subr.mxu0 0.0
        %703 = vmatpush1.msra.mxu0 0.0
        %704 = vmatprep.subr.mxu0 0.0
        %705 = vmatpush1.msra.mxu0 0.0
        %706 = vmatprep.subr.mxu0 0.0
        %707 = vmatpush1.msra.mxu0 0.0
        %708 = vmatprep.subr.mxu0 0.0
        %709 = vmatpush1.msra.mxu0 0.0
        %710 = vmatprep.subr.mxu0 0.0
        %711 = vmatpush1.msra.mxu0 0.0
        %712 = vmatprep.subr.mxu0 0.0
        %713 = vmatpush1.msra.mxu0 0.0
        %714 = vmatprep.subr.mxu0 0.0
        %715 = vmatpush1.msra.mxu0 0.0
        %716 = vmatprep.subr.mxu0 0.0
        %717 = vmatpush1.msra.mxu0 0.0
        %718 = vmatprep.subr.mxu0 0.0
        %719 = vmatpush1.msra.mxu0 0.0
        %720 = vmatprep.subr.mxu0 0.0
        %721 = vmatpush1.msra.mxu0 0.0
        %722 = vmatprep.subr.mxu0 0.0
        %723 = vmatpush1.msra.mxu0 0.0
        %724 = vmatprep.subr.mxu0 0.0
        %725 = vmatpush1.msra.mxu0 0.0
        %726 = vmatprep.subr.mxu0 0.0
        %727 = vmatpush1.msra.mxu0 0.0
        %728 = vmatprep.subr.mxu0 0.0
        %729 = vmatpush1.msra.mxu0 0.0
        %730 = vmatprep.subr.mxu0 0.0
        %731 = vmatpush1.msra.mxu0 0.0
        %732 = vmatprep.subr.mxu0 0.0
        %733 = vmatpush1.msra.mxu0 0.0
        %734 = vmatprep.subr.mxu0 0.0
        %735 = vmatpush1.msra.mxu0 0.0
        %736 = vmatprep.subr.mxu0 0.0
        %737 = vmatpush1.msra.mxu0 0.0
        %738 = vmatprep.subr.mxu0 0.0
        %739 = vmatpush1.msra.mxu0 0.0
        %740 = vmatprep.subr.mxu0 0.0
        %741 = vmatpush1.msra.mxu0 0.0
        %742 = vmatprep.mubr.f32.mxu0 0.0
        %743 = vmatmul.mubr.f32.gmra.mrb[0].mxu0 %v655
        %v744 = vpop.f32.mrb[0].mxu0
        %v745 = vadd.f32 0.0, %v744
        %v746 = vpop.f32.mrb[0].mxu0
        %747 = vmatprep.mubr.f32.mxu0 0.0
        %748 = vmatmul.mubr.f32.gmra.mrb[0].mxu0 %v658
        %v749 = vpop.f32.mrb[0].mxu0
        %v750 = vadd.f32 0.0, %v749
        %v751 = vpop.f32.mrb[0].mxu0
        %752 = vmatprep.mubr.f32.mxu0 0.0
        %753 = vmatmul.mubr.f32.gmra.mrb[0].mxu0 %v661
        %v754 = vpop.f32.mrb[0].mxu0
        %v755 = vadd.f32 0.0, %v754
        %v756 = vpop.f32.mrb[0].mxu0
        %757 = vmatprep.mubr.f32.mxu0 0.0
        %758 = vmatmul.mubr.f32.gmra.mrb[0].mxu0 %v664
        %v759 = vpop.f32.mrb[0].mxu0
        %v760 = vadd.f32 0.0, %v759
        %v761 = vpop.f32.mrb[0].mxu0
        %762 = vmatprep.mubr.f32.mxu0 0.0
        %763 = vmatmul.mubr.f32.gmra.mrb[0].mxu0 %v667
        %v764 = vpop.f32.mrb[0].mxu0
        %v765 = vadd.f32 0.0, %v764
        %v766 = vpop.f32.mrb[0].mxu0
        %767 = vmatprep.mubr.f32.mxu0 0.0
        %768 = vmatmul.mubr.f32.gmra.mrb[0].mxu0 %v670
        %v769 = vpop.f32.mrb[0].mxu0
        %v770 = vadd.f32 0.0, %v769
        %v771 = vpop.f32.mrb[0].mxu0
        %772 = vmatprep.mubr.f32.mxu0 0.0
        %773 = vmatmul.mubr.f32.gmra.mrb[0].mxu0 %v673
        %v774 = vpop.f32.mrb[0].mxu0
        %v775 = vadd.f32 0.0, %v774
        %v776 = vpop.f32.mrb[0].mxu0
        %777 = vmatprep.mubr.f32.mxu0 0.0
        %778 = vmatmul.mubr.f32.gmra.mrb[0].mxu0 %v676
        %v779 = vpop.f32.mrb[0].mxu0
        %v780 = vadd.f32 0.0, %v779
        %v781 = vpop.f32.mrb[0].mxu0
        %782 = vdwg.mxu0
        %v784 = vsel %vm314, %v636, 0
        %v787 = vsel %vm314, %v637, 0
        %v790 = vsel %vm314, %v638, 0
        %v793 = vsel %vm314, %v639, 0
        %795 = vmatprep.subr.mxu0 0.0
        %796 = vmatpush1.msra.mxu0 %v745
        %797 = vmatprep.subr.mxu0 0.0
        %798 = vmatpush1.msra.mxu0 %v750
        %799 = vmatprep.subr.mxu0 0.0
        %800 = vmatpush1.msra.mxu0 %v755
        %801 = vmatprep.subr.mxu0 0.0
        %802 = vmatpush1.msra.mxu0 %v760
        %803 = vmatprep.subr.mxu0 0.0
        %804 = vmatpush1.msra.mxu0 0.0
        %805 = vmatprep.subr.mxu0 0.0
        %806 = vmatpush1.msra.mxu0 0.0
        %807 = vmatprep.subr.mxu0 0.0
        %808 = vmatpush1.msra.mxu0 0.0
        %809 = vmatprep.subr.mxu0 0.0
        %810 = vmatpush1.msra.mxu0 0.0
        %811 = vmatprep.subr.mxu0 0.0
        %812 = vmatpush1.msra.mxu0 0.0
        %813 = vmatprep.subr.mxu0 0.0
        %814 = vmatpush1.msra.mxu0 0.0
        %815 = vmatprep.subr.mxu0 0.0
        %816 = vmatpush1.msra.mxu0 0.0
        %817 = vmatprep.subr.mxu0 0.0
        %818 = vmatpush1.msra.mxu0 0.0
        %819 = vmatprep.subr.mxu0 0.0
        %820 = vmatpush1.msra.mxu0 0.0
        %821 = vmatprep.subr.mxu0 0.0
        %822 = vmatpush1.msra.mxu0 0.0
        %823 = vmatprep.subr.mxu0 0.0
        %824 = vmatpush1.msra.mxu0 0.0
        %825 = vmatprep.subr.mxu0 0.0
        %826 = vmatpush1.msra.mxu0 0.0
        %827 = vmatprep.subr.mxu0 0.0
        %828 = vmatpush1.msra.mxu0 0.0
        %829 = vmatprep.subr.mxu0 0.0
        %830 = vmatpush1.msra.mxu0 0.0
        %831 = vmatprep.subr.mxu0 0.0
        %832 = vmatpush1.msra.mxu0 0.0
        %833 = vmatprep.subr.mxu0 0.0
        %834 = vmatpush1.msra.mxu0 0.0
        %835 = vmatprep.subr.mxu0 0.0
        %836 = vmatpush1.msra.mxu0 0.0
        %837 = vmatprep.subr.mxu0 0.0
        %838 = vmatpush1.msra.mxu0 0.0
        %839 = vmatprep.subr.mxu0 0.0
        %840 = vmatpush1.msra.mxu0 0.0
        %841 = vmatprep.subr.mxu0 0.0
        %842 = vmatpush1.msra.mxu0 0.0
        %843 = vmatprep.subr.mxu0 0.0
        %844 = vmatpush1.msra.mxu0 0.0
        %845 = vmatprep.subr.mxu0 0.0
        %846 = vmatpush1.msra.mxu0 0.0
        %847 = vmatprep.subr.mxu0 0.0
        %848 = vmatpush1.msra.mxu0 0.0
        %849 = vmatprep.subr.mxu0 0.0
        %850 = vmatpush1.msra.mxu0 0.0
        %851 = vmatprep.subr.mxu0 0.0
        %852 = vmatpush1.msra.mxu0 0.0
        %853 = vmatprep.subr.mxu0 0.0
        %854 = vmatpush1.msra.mxu0 0.0
        %855 = vmatprep.subr.mxu0 0.0
        %856 = vmatpush1.msra.mxu0 0.0
        %857 = vmatprep.subr.mxu0 0.0
        %858 = vmatpush1.msra.mxu0 0.0
        %859 = vmatprep.mubr.f32.mxu0 0.0
        %860 = vmatmul.mubr.f32.gmra.mrb[0].mxu0 %v784
        %v861 = vpop.f32.mrb[0].mxu0
        %v862 = vadd.f32 0.0, %v861
        %v863 = vpop.f32.mrb[0].mxu0
        %864 = vmatprep.mubr.f32.mxu0 0.0
        %865 = vmatmul.mubr.f32.gmra.mrb[0].mxu0 %v787
        %v866 = vpop.f32.mrb[0].mxu0
        %v867 = vadd.f32 0.0, %v866
        %v868 = vpop.f32.mrb[0].mxu0
        %869 = vmatprep.mubr.f32.mxu0 0.0
        %870 = vmatmul.mubr.f32.gmra.mrb[0].mxu0 %v790
        %v871 = vpop.f32.mrb[0].mxu0
        %v872 = vadd.f32 0.0, %v871
        %v873 = vpop.f32.mrb[0].mxu0
        %874 = vmatprep.mubr.f32.mxu0 0.0
        %875 = vmatmul.mubr.f32.gmra.mrb[0].mxu0 %v793
        %v876 = vpop.f32.mrb[0].mxu0
        %v877 = vadd.f32 0.0, %v876
        %v878 = vpop.f32.mrb[0].mxu0
        %879 = vdwg.mxu0
        %s880 = scalar_lea.vmem %s293, 32 [#allocation8]
        %881 = vst.msk [vmem:[%s880] sm:$0xff] %vm314, %v862
        %882 = vst.msk [vmem:[%s880 + $0x8] sm:$0xff] %vm314, %v867
        %883 = vst.msk [vmem:[%s880 + $0x10] sm:$0xff] %vm314, %v872
        %884 = vst.msk [vmem:[%s880 + $0x18] sm:$0xff] %vm314, %v877
        %885 = vmatprep.subr.mxu0 0.0
        %886 = vmatpush1.msra.mxu0 %v765
        %887 = vmatprep.subr.mxu0 0.0
        %888 = vmatpush1.msra.mxu0 %v770
        %889 = vmatprep.subr.mxu0 0.0
        %890 = vmatpush1.msra.mxu0 %v775
        %891 = vmatprep.subr.mxu0 0.0
        %892 = vmatpush1.msra.mxu0 %v780
        %893 = vmatprep.subr.mxu0 0.0
        %894 = vmatpush1.msra.mxu0 0.0
        %895 = vmatprep.subr.mxu0 0.0
        %896 = vmatpush1.msra.mxu0 0.0
        %897 = vmatprep.subr.mxu0 0.0
        %898 = vmatpush1.msra.mxu0 0.0
        %899 = vmatprep.subr.mxu0 0.0
        %900 = vmatpush1.msra.mxu0 0.0
        %901 = vmatprep.subr.mxu0 0.0
        %902 = vmatpush1.msra.mxu0 0.0
        %903 = vmatprep.subr.mxu0 0.0
        %904 = vmatpush1.msra.mxu0 0.0
        %905 = vmatprep.subr.mxu0 0.0
        %906 = vmatpush1.msra.mxu0 0.0
        %907 = vmatprep.subr.mxu0 0.0
        %908 = vmatpush1.msra.mxu0 0.0
        %909 = vmatprep.subr.mxu0 0.0
        %910 = vmatpush1.msra.mxu0 0.0
        %911 = vmatprep.subr.mxu0 0.0
        %912 = vmatpush1.msra.mxu0 0.0
        %913 = vmatprep.subr.mxu0 0.0
        %914 = vmatpush1.msra.mxu0 0.0
        %915 = vmatprep.subr.mxu0 0.0
        %916 = vmatpush1.msra.mxu0 0.0
        %917 = vmatprep.subr.mxu0 0.0
        %918 = vmatpush1.msra.mxu0 0.0
        %919 = vmatprep.subr.mxu0 0.0
        %920 = vmatpush1.msra.mxu0 0.0
        %921 = vmatprep.subr.mxu0 0.0
        %922 = vmatpush1.msra.mxu0 0.0
        %923 = vmatprep.subr.mxu0 0.0
        %924 = vmatpush1.msra.mxu0 0.0
        %925 = vmatprep.subr.mxu0 0.0
        %926 = vmatpush1.msra.mxu0 0.0
        %927 = vmatprep.subr.mxu0 0.0
        %928 = vmatpush1.msra.mxu0 0.0
        %929 = vmatprep.subr.mxu0 0.0
        %930 = vmatpush1.msra.mxu0 0.0
        %931 = vmatprep.subr.mxu0 0.0
        %932 = vmatpush1.msra.mxu0 0.0
        %933 = vmatprep.subr.mxu0 0.0
        %934 = vmatpush1.msra.mxu0 0.0
        %935 = vmatprep.subr.mxu0 0.0
        %936 = vmatpush1.msra.mxu0 0.0
        %937 = vmatprep.subr.mxu0 0.0
        %938 = vmatpush1.msra.mxu0 0.0
        %939 = vmatprep.subr.mxu0 0.0
        %940 = vmatpush1.msra.mxu0 0.0
        %941 = vmatprep.subr.mxu0 0.0
        %942 = vmatpush1.msra.mxu0 0.0
        %943 = vmatprep.subr.mxu0 0.0
        %944 = vmatpush1.msra.mxu0 0.0
        %945 = vmatprep.subr.mxu0 0.0
        %946 = vmatpush1.msra.mxu0 0.0
        %947 = vmatprep.subr.mxu0 0.0
        %948 = vmatpush1.msra.mxu0 0.0
        %949 = vmatprep.mubr.f32.mxu0 0.0
        %950 = vmatmul.mubr.f32.gmra.mrb[0].mxu0 %v784
        %v951 = vpop.f32.mrb[0].mxu0
        %v952 = vadd.f32 0.0, %v951
        %v953 = vpop.f32.mrb[0].mxu0
        %954 = vmatprep.mubr.f32.mxu0 0.0
        %955 = vmatmul.mubr.f32.gmra.mrb[0].mxu0 %v787
        %v956 = vpop.f32.mrb[0].mxu0
        %v957 = vadd.f32 0.0, %v956
        %v958 = vpop.f32.mrb[0].mxu0
        %959 = vmatprep.mubr.f32.mxu0 0.0
        %960 = vmatmul.mubr.f32.gmra.mrb[0].mxu0 %v790
        %v961 = vpop.f32.mrb[0].mxu0
        %v962 = vadd.f32 0.0, %v961
        %v963 = vpop.f32.mrb[0].mxu0
        %964 = vmatprep.mubr.f32.mxu0 0.0
        %965 = vmatmul.mubr.f32.gmra.mrb[0].mxu0 %v793
        %v966 = vpop.f32.mrb[0].mxu0
        %v967 = vadd.f32 0.0, %v966
        %v968 = vpop.f32.mrb[0].mxu0
        %969 = vdwg.mxu0
        %s970 = scalar_lea.vmem %s293, 96 [#allocation8]
        %971 = vst.msk [vmem:[%s970] sm:$0xff] %vm314, %v952
        %972 = vst.msk [vmem:[%s970 + $0x8] sm:$0xff] %vm314, %v957
        %973 = vst.msk [vmem:[%s970 + $0x10] sm:$0xff] %vm314, %v962
        %974 = vst.msk [vmem:[%s970 + $0x18] sm:$0xff] %vm314, %v967
        %s975 = sand.u32 %s109, 1
        %s976 = scalar_lea.sflag [#allocation4], %s975
        %s977 = sand.u32 %s109, 1
        %s978 = smul.addr %s977, 128
        %s979 = scalar_lea.vmem [#allocation8], %s978
        // Predicated region
        $region45: #{tpu_custom_call.1} parent=31 // pred_check
          %p980 = pneg %p119
        $region46: #{tpu_custom_call.1} parent=31 // pred_check_branch
          %982 = sbr.rel (%p980) target = $region48
        $region47: #{tpu_custom_call.1} parent=31 // pred_region
          #allocation12 [shape = 'u32[6]{0}', space=smem, size = 0x18, scoped, tag = 'DMA stride descriptor']
          %s983 = smul.u32 2, %s23
          %s985 = ssub.s32 2048, 2048
          %986 = vsyncadd %s976, %s985
          %s987 = smul.addr %s983, 4
          %s988 = smul.addr %s987, 128
          %s989 = scalar_lea.hbm %s3, %s988
          %s991 = sshll.u32 1, 14
          %s992 = sxor.u32 4294967295, %s991
          %s995 = sshll.u32 7, 18
          %s996 = sxor.u32 4294967295, %s995
          %s997 = sand.u32 0, %s996
          %s999 = sor.u32 %s997, 0
          %s1001 = sshll.u32 3, 24
          %s1002 = sxor.u32 4294967295, %s1001
          %s1003 = sand.u32 %s999, %s1002
          %s1005 = sor.u32 %s1003, 0
          %s1006 = sshll.u32 %s979, 4
          %s1007 = int_to_ptr.vmem [resolvable:$true] %s1006
          %1013 = sst [smem:[#allocation12]] 1024
          %s1014 = scalar_lea.smem [#allocation12], 1
          %1015 = sst [smem:[%s1014]] 2048
          %s1016 = scalar_lea.smem [#allocation12], 2
          %1017 = sst [smem:[%s1016]] 8
          %s1018 = scalar_lea.smem [#allocation12], 3
          %1019 = sst [smem:[%s1018]] 128
          %s1020 = scalar_lea.smem [#allocation12], 4
          %1021 = sst [smem:[%s1020]] 128
          %s1022 = scalar_lea.smem [#allocation12], 5
          %1023 = sst [smem:[%s1022]] 8
          %1025 = dma.general %s1007, 2048, %s989, %s976, [#allocation11], [#allocation12], %s1005, 0
        $region48: #{tpu_custom_call.1} parent=31 // pred_fallthru
          _
      $region32: #{tpu_custom_call.1} parent=5 // pred_fallthru
        _
      %p1026 = scmp.le.s32.totalorder 2, %s18
      // Predicated region
      $region49: #{tpu_custom_call.1} parent=5 // pred_check
        %p1027 = pneg %p1026
      $region50: #{tpu_custom_call.1} parent=5 // pred_check_branch
        %1029 = sbr.rel (%p1027) target = $region52
      $region51: #{tpu_custom_call.1} parent=5 // pred_region
        %s1030 = ssub.s32 %s18, 2
        // Predicated region
        $region53: #{tpu_custom_call.1} parent=51 // pred_check
          %p1031 = pneg %p125
        $region54: #{tpu_custom_call.1} parent=51 // pred_check_branch
          %1033 = sbr.rel (%p1031) target = $region56
        $region55: #{tpu_custom_call.1} parent=51 // pred_region
          %s1034 = sand.u32 %s110, 1
          %s1035 = scalar_lea.sflag [#allocation4], %s1034
          %s1036 = sand.u32 %s110, 1
          %s1037 = smul.addr %s1036, 128
          %s1038 = scalar_lea.vmem [#allocation8], %s1037
          %1039 = dma.done %s1035, 2048
        $region56: #{tpu_custom_call.1} parent=51 // pred_fallthru
          _
      $region52: #{tpu_custom_call.1} parent=5 // pred_fallthru
        _
    $region6: #{tpu_custom_call.1} parent=1 // loop_footer
      %s22 = sadd.s32 1, %s18
    $region7: #{tpu_custom_call.1} parent=1 // loop_footer_branch
      %17 = sbr.rel target = $region3
    $region8: #{tpu_custom_call.1} parent=1 // loop_exit
      _
    %1040 = vsyncpa [#allocation3], 1
    %s1041 = scalar_lea.sflag [#allocation3], 1
    %1042 = vsyncpa %s1041, 1
    %1043 = vsyncpa [#allocation6], 1
    %s1044 = scalar_lea.sflag [#allocation6], 1
    %1045 = vsyncpa %s1044, 1
    %1046 = vsyncpa [#allocation4], 1
    %s1047 = scalar_lea.sflag [#allocation4], 1
    %1048 = vsyncpa %s1047, 1

</llo_original>
